<compile_context>
chip_gen: v6e
topology: v6e:2x2x1
jax: 0.10.0
libtpu: 0.0.40
codegen_flags: <defaults>
</compile_context>

<pallas_src>
import functools

import jax
import jax.numpy as jnp
from jax.experimental import pallas as pl
from jax.experimental.pallas import tpu as pltpu


def time2vec_kernel(x_ref, w_ref, b_ref, o_ref, *, embed_dim, precision):
    # x_ref: (TM, G*D), w_ref: (G*D, G*E), b_ref: (1, G*E), o_ref: (TM, G*E)
    lin = jnp.dot(
        x_ref[...],
        w_ref[...],
        preferred_element_type=jnp.float32,
        precision=precision,
    )
    lin = lin + b_ref[...]                         # bias broadcast over rows

    # v0/v1 select mask computed on a single (1, G*E) row (hoisted from the
    # full tile; ~2 vregs of VALU work instead of ~TM/8 x that) and broadcast
    # by the select.  Lanes with (col % embed_dim) == 0 keep the linear term.
    ge = lin.shape[-1]
    col = jax.lax.broadcasted_iota(jnp.int32, (1, ge), 1)
    if embed_dim & (embed_dim - 1) == 0:           # power-of-two fast path
        is_v0 = (col & (embed_dim - 1)) == 0
    else:
        is_v0 = (col % embed_dim) == 0
    o_ref[...] = jnp.where(is_v0, lin, jnp.sin(lin)).astype(o_ref.dtype)


def fuse_time2vec_params(w0, b0, w, b, *, group=None):
    """Build the fused, row-grouped (block-diagonal) parameters once at init.

    Returns (w_big, b_big, embed_dim, group) where
      w_big: (group*input_dim, group*embed_dim)  block-diagonal copies of [w0|w]
      b_big: (1, group*embed_dim)                [b0|b] tiled `group` times
    """
    w_full = jnp.concatenate([w0, w], axis=-1)          # (D, E)
    b_full = jnp.concatenate([b0, b], axis=-1)          # (E,)
    input_dim, embed_dim = w_full.shape
    if group is None:
        group = max(1, 128 // input_dim)                # lane-dense K
    g = int(group)
    eye = jnp.eye(g, dtype=w_full.dtype)                # (G, G)
    # w_big[gd*D + d, ge*E + e] = (gd == ge) * w_full[d, e]
    w_big = (eye[:, None, :, None] * w_full[None, :, None, :]).reshape(
        g * input_dim, g * embed_dim)
    b_big = jnp.tile(b_full, g)[None, :]                # (1, G*E)
    return w_big, b_big, embed_dim, g


def time2vec_apply(x, w_big, b_big, *, embed_dim, group, tm_max=2048,
                   precision=jax.lax.Precision.HIGH, out_dtype=None):
    """x: (batch, seq, input_dim) -> (batch, seq, embed_dim).

    tm_max: raise to 4096 on v7x (3.2 TB/s HBM) to amortize per-step overhead.
    out_dtype: e.g. jnp.bfloat16 to cut store-side HBM traffic ~33%.
    """
    batch, seq, input_dim = x.shape
    g = group
    gd, ge = w_big.shape
    assert gd == g * input_dim and ge == g * embed_dim
    out_dtype = jnp.dtype(x.dtype if out_dtype is None else out_dtype)

    M = batch * seq
    mg = pl.cdiv(M, g)          # grouped rows
    m_pad = mg * g              # pad only to row-group granularity (< g rows)

    x2d = x.reshape(M, input_dim)
    if m_pad > M:               # tiny (< g rows) pad; no copy when aligned
        x2d = jnp.pad(x2d, ((0, m_pad - M), (0, 0)))
    xg = x2d.reshape(mg, gd)    # lane-dense input slab (free reshape)

    # Sublane granularity of the tile row count (16 for 16-bit dtypes).
    sub = 8 if (jnp.dtype(x.dtype).itemsize >= 4
                and out_dtype.itemsize >= 4) else 16
    # Tile rows: big enough to amortize the ~0.35 us per-step overhead, capped
    # so the grid has >= 2 steps whenever there is enough work (v7x megacore).
    # The trailing tile may be partial; Pallas clips its DMAs.
    if mg >= 2 * sub:
        tm = min(tm_max, pl.cdiv(pl.cdiv(mg, 2), sub) * sub)
    else:
        tm = pl.cdiv(mg, sub) * sub
    tm = max(tm, sub)
    n_tiles = pl.cdiv(mg, tm)

    cost = pl.CostEstimate(
        flops=2 * mg * gd * ge,
        transcendentals=mg * g * (embed_dim - 1),
        bytes_accessed=(xg.size * xg.dtype.itemsize
                        + w_big.size * w_big.dtype.itemsize
                        + b_big.size * b_big.dtype.itemsize
                        + mg * ge * out_dtype.itemsize),
    )

    kernel = functools.partial(time2vec_kernel, embed_dim=embed_dim,
                               precision=precision)
    out_g = pl.pallas_call(
        kernel,
        out_shape=jax.ShapeDtypeStruct((mg, ge), out_dtype),
        grid=(n_tiles,),
        in_specs=[
            pl.BlockSpec((tm, gd), lambda i: (i, 0)),     # tiled input rows
            pl.BlockSpec((gd, ge), lambda i: (0, 0)),     # resident weights
            pl.BlockSpec((1, ge), lambda i: (0, 0)),      # resident bias
        ],
        out_specs=pl.BlockSpec((tm, ge), lambda i: (i, 0)),
        compiler_params=pltpu.CompilerParams(
            dimension_semantics=("parallel",)),           # megacore on v7x
        cost_estimate=cost,
    )(xg, w_big, b_big)

    # Grouped (mg, G*E) output is row-major-identical to (m_pad, E): reshape is
    # free; the slice only materializes when a (< g row) pad was added.
    out2d = out_g.reshape(m_pad, embed_dim)
    if m_pad > M:
        out2d = out2d[:M]
    return out2d.reshape(batch, seq, embed_dim)


def time2vec(x, w0, b0, w, b):
    """Convenience wrapper matching the PyTorch forward (fuses params per call).

    For repeated forwards, call fuse_time2vec_params() once at init and reuse
    the result with time2vec_apply().
    """
    w_big, b_big, embed_dim, group = fuse_time2vec_params(w0, b0, w, b)
    return time2vec_apply(x, w_big, b_big, embed_dim=embed_dim, group=group)


if __name__ == "__main__":
    # Small deterministic setup: input_dim=16, embed_dim=32, batch=2, seq=8.
    input_dim, embed_dim = 16, 32
    batch, seq = 2, 8

    key = jax.random.PRNGKey(0)
    kx, kw0, kb0, kw, kb, kx2 = jax.random.split(key, 6)

    x = jax.random.normal(kx, (batch, seq, input_dim), dtype=jnp.float32)
    w0 = jax.random.normal(kw0, (input_dim, 1), dtype=jnp.float32)
    b0 = jax.random.normal(kb0, (1,), dtype=jnp.float32)
    w = jax.random.normal(kw, (input_dim, embed_dim - 1), dtype=jnp.float32)
    b = jax.random.normal(kb, (embed_dim - 1,), dtype=jnp.float32)

    # Params fused once (init-time), reused per forward.
    w_big, b_big, e_dim, group = fuse_time2vec_params(w0, b0, w, b)

    def ref_fn(xin):   # full-f32 PyTorch-spec math
        hi = jax.lax.Precision.HIGHEST
        v0 = jnp.matmul(xin, w0, precision=hi) + b0
        v1 = jnp.sin(jnp.matmul(xin, w, precision=hi) + b)
        return jnp.concatenate([v0, v1], axis=-1)

    # Second case: batch*seq not a multiple of the row group -> exercises the
    # < group-row pad and the partial trailing grid tile.
    x2 = jax.random.normal(kx2, (3, 7, input_dim), dtype=jnp.float32)

    for xin in (x, x2):
        ref = ref_fn(xin)

        # Structural check at full f32: layout / grouping / masking are exact.
        out_hi = time2vec_apply(xin, w_big, b_big, embed_dim=e_dim,
                                group=group,
                                precision=jax.lax.Precision.HIGHEST)
        out_hi = jax.block_until_ready(out_hi)
        assert out_hi.shape == xin.shape[:2] + (e_dim,)
        assert jnp.allclose(out_hi, ref, atol=1e-5, rtol=1e-5)

        # Default fast path: Precision.HIGH (3-pass bf16 splitting, per perf
        # review). Per-product relative error of bf16x3 is ~2^-16, so compare
        # at a tolerance appropriate for that precision class.
        out_hp = time2vec_apply(xin, w_big, b_big, embed_dim=e_dim,
                                group=group)
        out_hp = jax.block_until_ready(out_hp)
        assert out_hp.shape == xin.shape[:2] + (e_dim,)
        assert jnp.allclose(out_hp, ref, atol=2e-4, rtol=1e-3)

    print("KERNEL_OK")
</pallas_src>

<mosaic_0001>
module attributes {stable_mosaic.version = 11 : i64} {
  func.func @time2vec_kernel(%arg0: i32, %arg1: memref<8x128xf32, #tpu.memory_space<vmem>>, %arg2: memref<128x256xf32, #tpu.memory_space<vmem>>, %arg3: memref<1x256xf32, #tpu.memory_space<vmem>>, %arg4: memref<8x256xf32, #tpu.memory_space<vmem>>) attributes {dimension_semantics = [#tpu.dimension_semantics<parallel>], iteration_bounds = array<i64: 1>, scalar_prefetch = 0 : i64, scratch_operands = 0 : i64, tpu.core_type = #tpu.core_type<tc>, window_params = [{transform_indices = @transform_0, window_bounds = array<i64: 8, 128>}, {pipeline_mode = #tpu.pipeline_mode<synchronous>, transform_indices = @transform_1, window_bounds = array<i64: 128, 256>}, {pipeline_mode = #tpu.pipeline_mode<synchronous>, transform_indices = @transform_2, window_bounds = array<i64: 1, 256>}, {transform_indices = @transform_3, window_bounds = array<i64: 8, 256>}]} {
    %c0 = arith.constant 0 : index
    %c0_0 = arith.constant 0 : index
    %0 = vector.load %arg1[%c0, %c0_0] : memref<8x128xf32, #tpu.memory_space<vmem>>, vector<8x128xf32>
    %c0_1 = arith.constant 0 : index
    %c0_2 = arith.constant 0 : index
    %1 = vector.load %arg2[%c0_1, %c0_2] : memref<128x256xf32, #tpu.memory_space<vmem>>, vector<128x256xf32>
    %cst = arith.constant dense<0.000000e+00> : vector<8x256xf32>
    %2 = tpu.matmul %0, %1, %cst {dimension_numbers = #tpu.dot_dimension_numbers<[1], [0], [0], [1], [0, 0, 1, 1], [], []>, precision = #tpu.contract_precision<fp32>} : vector<8x128xf32>, vector<128x256xf32>, vector<8x256xf32> -> vector<8x256xf32>
    %c0_3 = arith.constant 0 : index
    %c0_4 = arith.constant 0 : index
    %3 = vector.load %arg3[%c0_3, %c0_4] : memref<1x256xf32, #tpu.memory_space<vmem>>, vector<1x256xf32>
    %4 = vector.broadcast %3 : vector<1x256xf32> to vector<8x256xf32>
    %5 = arith.addf %2, %4 : vector<8x256xf32>
    %6 = tpu.iota {dimensions = array<i32: 1>} : vector<1x256xi32>
    %c31_i32 = arith.constant 31 : i32
    %7 = vector.broadcast %c31_i32 : i32 to vector<1x256xi32>
    %8 = arith.andi %6, %7 : vector<1x256xi32>
    %c0_i32 = arith.constant 0 : i32
    %9 = vector.broadcast %c0_i32 : i32 to vector<1x256xi32>
    %10 = arith.cmpi eq, %8, %9 : vector<1x256xi32>
    %11 = math.sin %5 : vector<8x256xf32>
    %12 = vector.shape_cast %10 : vector<1x256xi1> to vector<1x256xi1>
    %13 = vector.broadcast %12 : vector<1x256xi1> to vector<8x256xi1>
    %14 = arith.select %13, %5, %11 : vector<8x256xi1>, vector<8x256xf32>
    %c0_5 = arith.constant 0 : index
    %c0_6 = arith.constant 0 : index
    %15 = vector.load %arg4[%c0_5, %c0_6] : memref<8x256xf32, #tpu.memory_space<vmem>>, vector<8x256xf32>
    tpu.vector_store %arg4[%c0_5, %c0_6], %14 {strides = array<i32>} : memref<8x256xf32, #tpu.memory_space<vmem>>, vector<8x256xf32>,
    return
  }
  func.func @transform_0(%arg0: i32) -> (i32, i32) {
    %c0_i32 = arith.constant 0 : i32
    %c0_i32_0 = arith.constant 0 : i32
    return %arg0, %c0_i32 : i32, i32
  }
  func.func @transform_1(%arg0: i32) -> (i32, i32) {
    %c0_i32 = arith.constant 0 : i32
    %c0_i32_0 = arith.constant 0 : i32
    %c0_i32_1 = arith.constant 0 : i32
    return %c0_i32, %c0_i32_0 : i32, i32
  }
  func.func @transform_2(%arg0: i32) -> (i32, i32) {
    %c0_i32 = arith.constant 0 : i32
    %c0_i32_0 = arith.constant 0 : i32
    %c0_i32_1 = arith.constant 0 : i32
    return %c0_i32, %c0_i32_0 : i32, i32
  }
  func.func @transform_3(%arg0: i32) -> (i32, i32) {
    %c0_i32 = arith.constant 0 : i32
    %c0_i32_0 = arith.constant 0 : i32
    return %arg0, %c0_i32 : i32, i32
  }
}

</mosaic_0001>

<llo_original>
// kernel: tpu_custom_call.1
$region0: #{tpu_custom_call.1}
  #allocation0 [shape = 'u32[]', space=smem, size = 0x4, offset = 0x4, fixed_abs, tag = 'smem constant byte address 0x4 - core index']
  #allocation1 [shape = 'u32[144,128]{1,0:T(1,128)}', space=vmem, size = 0x12000, scoped, tag = 'internal scratch']
  %s0 = inlined_call_operand.hbm [shape: f32[2,128], index: 0, kind: input, shape index: {}]
  %s1 = inlined_call_operand.hbm [shape: f32[128,256], index: 1, kind: input, shape index: {}]
  %s2 = inlined_call_operand.vmem [shape: f32[1,256], index: 2, kind: input, shape index: {}]
  %s3 = inlined_call_operand.hbm [shape: f32[2,256], index: 3, kind: output, shape index: {}]
  %s4 = sld [smem:[#allocation0]]
  $region30: #{tpu_custom_call.1} parent=0
    _
  %s6 = ssub.s32 1, %s4
  %s7 = scalar_select 0, %s6, %s4
  $region1: #{tpu_custom_call.1} parent=0
    #allocation2 [shape = 'u8[4096]{0}', space=vmem, size = 0x1000, scoped, tag = 'input window, operand 0, single buffered']
    #allocation3 [shape = 's32[1]{0}', space=sflag, size = 0x4, scoped, tag = 'scoped memory for tpu_custom_call.1']
    #allocation4 [shape = 's32[1]{0}', space=sflag, size = 0x4, scoped, tag = 'scoped memory for tpu_custom_call.1']
    #allocation5 [shape = 'u8[131072]{0}', space=vmem, size = 0x20000, scoped, tag = 'input window, operand 1, single buffered']
    #allocation6 [shape = 's32[1]{0}', space=sflag, size = 0x4, scoped, tag = 'scoped memory for tpu_custom_call.1']
    #allocation7 [shape = 'u8[8192]{0}', space=vmem, size = 0x2000, scoped, tag = 'output window, operand 0, single buffered']
    %8 = vsyncpa [#allocation3], 0
    %9 = vsyncpa [#allocation6], 0
    %10 = vsyncpa [#allocation4], 0
    // Predicated region
    $region2: #{tpu_custom_call.1} parent=1 // pred_check
      _
    $region3: #{tpu_custom_call.1} parent=1 // pred_check_branch
      %12 = sbr.rel (0) target = $region5
    $region4: #{tpu_custom_call.1} parent=1 // pred_region
      %s14 = ssub.s32 128, 32
      %15 = vsyncadd [#allocation3], %s14
      %s16 = sshll.u32 [#allocation2], 4
      %s17 = int_to_ptr.vmem [resolvable:$true] %s16
      %22 = dma.hbm_to_vmem [thread:$0]  %s0, 32, %s17, [#allocation3], 32, 32, 2
    $region5: #{tpu_custom_call.1} parent=1 // pred_fallthru
      _
    // Predicated region
    $region6: #{tpu_custom_call.1} parent=1 // pred_check
      _
    $region7: #{tpu_custom_call.1} parent=1 // pred_check_branch
      %24 = sbr.rel (0) target = $region9
    $region8: #{tpu_custom_call.1} parent=1 // pred_region
      %s26 = ssub.s32 4096, 4096
      %27 = vsyncadd [#allocation6], %s26
      %s28 = sshll.u32 [#allocation5], 4
      %s29 = int_to_ptr.vmem [resolvable:$true] %s28
      %34 = dma.hbm_to_vmem [thread:$0]  %s1, 4096, %s29, [#allocation6], 256, 256, 16
    $region9: #{tpu_custom_call.1} parent=1 // pred_fallthru
      _
    // Predicated region
    $region10: #{tpu_custom_call.1} parent=1 // pred_check
      _
    $region11: #{tpu_custom_call.1} parent=1 // pred_check_branch
      %36 = sbr.rel (0) target = $region13
    $region12: #{tpu_custom_call.1} parent=1 // pred_region
      _
    $region13: #{tpu_custom_call.1} parent=1 // pred_fallthru
      _
    // Predicated region
    $region14: #{tpu_custom_call.1} parent=1 // pred_check
      _
    $region15: #{tpu_custom_call.1} parent=1 // pred_check_branch
      %38 = sbr.rel (0) target = $region17
    $region16: #{tpu_custom_call.1} parent=1 // pred_region
      %39 = dma.done [#allocation3], 128
    $region17: #{tpu_custom_call.1} parent=1 // pred_fallthru
      _
    // Predicated region
    $region18: #{tpu_custom_call.1} parent=1 // pred_check
      _
    $region19: #{tpu_custom_call.1} parent=1 // pred_check_branch
      %41 = sbr.rel (0) target = $region21
    $region20: #{tpu_custom_call.1} parent=1 // pred_region
      %42 = dma.done [#allocation6], 4096
    $region21: #{tpu_custom_call.1} parent=1 // pred_fallthru
      _
    %v43 = vld [vmem:[#allocation2] sm:$0xff]
    %v44 = vld [vmem:[#allocation5] sm:$0xff]
    %v45 = vld [vmem:[#allocation5 + $0x8] sm:$0xff]
    %v46 = vld [vmem:[#allocation5 + $0x10] sm:$0xff]
    %v47 = vld [vmem:[#allocation5 + $0x18] sm:$0xff]
    %v48 = vld [vmem:[#allocation5 + $0x20] sm:$0xff]
    %v49 = vld [vmem:[#allocation5 + $0x28] sm:$0xff]
    %v50 = vld [vmem:[#allocation5 + $0x30] sm:$0xff]
    %v51 = vld [vmem:[#allocation5 + $0x38] sm:$0xff]
    %v52 = vld [vmem:[#allocation5 + $0x40] sm:$0xff]
    %v53 = vld [vmem:[#allocation5 + $0x48] sm:$0xff]
    %v54 = vld [vmem:[#allocation5 + $0x50] sm:$0xff]
    %v55 = vld [vmem:[#allocation5 + $0x58] sm:$0xff]
    %v56 = vld [vmem:[#allocation5 + $0x60] sm:$0xff]
    %v57 = vld [vmem:[#allocation5 + $0x68] sm:$0xff]
    %v58 = vld [vmem:[#allocation5 + $0x70] sm:$0xff]
    %v59 = vld [vmem:[#allocation5 + $0x78] sm:$0xff]
    %v60 = vld [vmem:[#allocation5 + $0x80] sm:$0xff]
    %v61 = vld [vmem:[#allocation5 + $0x88] sm:$0xff]
    %v62 = vld [vmem:[#allocation5 + $0x90] sm:$0xff]
    %v63 = vld [vmem:[#allocation5 + $0x98] sm:$0xff]
    %v64 = vld [vmem:[#allocation5 + $0xa0] sm:$0xff]
    %v65 = vld [vmem:[#allocation5 + $0xa8] sm:$0xff]
    %v66 = vld [vmem:[#allocation5 + $0xb0] sm:$0xff]
    %v67 = vld [vmem:[#allocation5 + $0xb8] sm:$0xff]
    %v68 = vld [vmem:[#allocation5 + $0xc0] sm:$0xff]
    %v69 = vld [vmem:[#allocation5 + $0xc8] sm:$0xff]
    %v70 = vld [vmem:[#allocation5 + $0xd0] sm:$0xff]
    %v71 = vld [vmem:[#allocation5 + $0xd8] sm:$0xff]
    %v72 = vld [vmem:[#allocation5 + $0xe0] sm:$0xff]
    %v73 = vld [vmem:[#allocation5 + $0xe8] sm:$0xff]
    %v74 = vld [vmem:[#allocation5 + $0xf0] sm:$0xff]
    %v75 = vld [vmem:[#allocation5 + $0xf8] sm:$0xff]
    %v76 = vld [vmem:[%s2] sm:$0x3]
    %v78 = vlaneseq
    %v79 = vshrl.u32 %v78, 7
    %v80 = vsub.s32 0, %v79
    %v81 = vrot.slane %v76, %v80
    %v82 = vlaneseq
    %v83 = vshrl.u32 %v82, 7
    %v84 = vsub.s32 1, %v83
    %v85 = vrot.slane %v76, %v84
    %v88 = vand.u32 %v75, 4294901760
    %89 = vmatprep.subr.mxu0 %v88
    %v90 = vand.u32 %v74, 4294901760
    %91 = vmatpush1.msra.mxu0 %v90
    %v92 = vand.u32 %v73, 4294901760
    %93 = vmatprep.subr.mxu0 %v92
    %v94 = vand.u32 %v72, 4294901760
    %95 = vmatpush1.msra.mxu0 %v94
    %v96 = vand.u32 %v71, 4294901760
    %97 = vmatprep.subr.mxu0 %v96
    %v98 = vand.u32 %v70, 4294901760
    %99 = vmatpush1.msra.mxu0 %v98
    %v100 = vand.u32 %v69, 4294901760
    %101 = vmatprep.subr.mxu0 %v100
    %v102 = vand.u32 %v68, 4294901760
    %103 = vmatpush1.msra.mxu0 %v102
    %v104 = vand.u32 %v67, 4294901760
    %105 = vmatprep.subr.mxu0 %v104
    %v106 = vand.u32 %v66, 4294901760
    %107 = vmatpush1.msra.mxu0 %v106
    %v108 = vand.u32 %v65, 4294901760
    %109 = vmatprep.subr.mxu0 %v108
    %v110 = vand.u32 %v64, 4294901760
    %111 = vmatpush1.msra.mxu0 %v110
    %v112 = vand.u32 %v63, 4294901760
    %113 = vmatprep.subr.mxu0 %v112
    %v114 = vand.u32 %v62, 4294901760
    %115 = vmatpush1.msra.mxu0 %v114
    %v116 = vand.u32 %v61, 4294901760
    %117 = vmatprep.subr.mxu0 %v116
    %v118 = vand.u32 %v60, 4294901760
    %119 = vmatpush1.msra.mxu0 %v118
    %v120 = vand.u32 %v59, 4294901760
    %121 = vmatprep.subr.mxu0 %v120
    %v122 = vand.u32 %v58, 4294901760
    %123 = vmatpush1.msra.mxu0 %v122
    %v124 = vand.u32 %v57, 4294901760
    %125 = vmatprep.subr.mxu0 %v124
    %v126 = vand.u32 %v56, 4294901760
    %127 = vmatpush1.msra.mxu0 %v126
    %v128 = vand.u32 %v55, 4294901760
    %129 = vmatprep.subr.mxu0 %v128
    %v130 = vand.u32 %v54, 4294901760
    %131 = vmatpush1.msra.mxu0 %v130
    %v132 = vand.u32 %v53, 4294901760
    %133 = vmatprep.subr.mxu0 %v132
    %v134 = vand.u32 %v52, 4294901760
    %135 = vmatpush1.msra.mxu0 %v134
    %v136 = vand.u32 %v51, 4294901760
    %137 = vmatprep.subr.mxu0 %v136
    %v138 = vand.u32 %v50, 4294901760
    %139 = vmatpush1.msra.mxu0 %v138
    %v140 = vand.u32 %v49, 4294901760
    %141 = vmatprep.subr.mxu0 %v140
    %v142 = vand.u32 %v48, 4294901760
    %143 = vmatpush1.msra.mxu0 %v142
    %v144 = vand.u32 %v47, 4294901760
    %145 = vmatprep.subr.mxu0 %v144
    %v146 = vand.u32 %v46, 4294901760
    %147 = vmatpush1.msra.mxu0 %v146
    %v148 = vand.u32 %v45, 4294901760
    %149 = vmatprep.subr.mxu0 %v148
    %v150 = vand.u32 %v44, 4294901760
    %151 = vmatpush1.msra.mxu0 %v150
    %152 = vmatprep.subr.mxu0 0.0
    %153 = vmatpush2.msra.mxu0 0.0
    %154 = vmatprep.subr.mxu0 0.0
    %155 = vmatpush2.msra.mxu0 0.0
    %156 = vmatprep.subr.mxu0 0.0
    %157 = vmatpush2.msra.mxu0 0.0
    %158 = vmatprep.subr.mxu0 0.0
    %159 = vmatpush2.msra.mxu0 0.0
    %160 = vmatprep.subr.mxu0 0.0
    %161 = vmatpush2.msra.mxu0 0.0
    %162 = vmatprep.subr.mxu0 0.0
    %163 = vmatpush2.msra.mxu0 0.0
    %164 = vmatprep.subr.mxu0 0.0
    %165 = vmatpush2.msra.mxu0 0.0
    %166 = vmatprep.subr.mxu0 0.0
    %167 = vmatpush2.msra.mxu0 0.0
    %168 = vmatprep.subr.mxu0 0.0
    %169 = vmatpush2.msra.mxu0 0.0
    %170 = vmatprep.subr.mxu0 0.0
    %171 = vmatpush2.msra.mxu0 0.0
    %172 = vmatprep.subr.mxu0 0.0
    %173 = vmatpush2.msra.mxu0 0.0
    %174 = vmatprep.subr.mxu0 0.0
    %175 = vmatpush2.msra.mxu0 0.0
    %176 = vmatprep.subr.mxu0 0.0
    %177 = vmatpush2.msra.mxu0 0.0
    %178 = vmatprep.subr.mxu0 0.0
    %179 = vmatpush2.msra.mxu0 0.0
    %180 = vmatprep.subr.mxu0 0.0
    %181 = vmatpush2.msra.mxu0 0.0
    %182 = vmatprep.subr.mxu0 0.0
    %183 = vmatpush2.msra.mxu0 0.0
    %184 = vmatprep.mubr.f32.mxu0 0.0
    %v185 = vand.u32 %v43, 4294901760
    %v186 = vsub.f32 %v43, %v185
    %v187 = vand.u32 %v186, 4294901760
    %v188 = vsub.f32 %v186, %v187
    %v189 = vand.u32 %v188, 4294901760
    %190 = vmatmul.mubr.f32.gmra.mxu0 %v189
    %v191 = vpop.f32.mrf.mxu0
    %v192 = vadd.f32 %v81, %v191
    %v193 = vpop.f32.mrf.mxu0
    %v194 = vadd.f32 %v85, %v193
    %195 = vdwg.mxu0
    %v196 = vand.u32 %v75, 4294901760
    %v197 = vsub.f32 %v75, %v196
    %v198 = vand.u32 %v197, 4294901760
    %v199 = vsub.f32 %v197, %v198
    %v200 = vand.u32 %v199, 4294901760
    %201 = vmatprep.subr.mxu0 %v200
    %v202 = vand.u32 %v74, 4294901760
    %v203 = vsub.f32 %v74, %v202
    %v204 = vand.u32 %v203, 4294901760
    %v205 = vsub.f32 %v203, %v204
    %v206 = vand.u32 %v205, 4294901760
    %207 = vmatpush1.msra.mxu0 %v206
    %v208 = vand.u32 %v73, 4294901760
    %v209 = vsub.f32 %v73, %v208
    %v210 = vand.u32 %v209, 4294901760
    %v211 = vsub.f32 %v209, %v210
    %v212 = vand.u32 %v211, 4294901760
    %213 = vmatprep.subr.mxu0 %v212
    %v214 = vand.u32 %v72, 4294901760
    %v215 = vsub.f32 %v72, %v214
    %v216 = vand.u32 %v215, 4294901760
    %v217 = vsub.f32 %v215, %v216
    %v218 = vand.u32 %v217, 4294901760
    %219 = vmatpush1.msra.mxu0 %v218
    %v220 = vand.u32 %v71, 4294901760
    %v221 = vsub.f32 %v71, %v220
    %v222 = vand.u32 %v221, 4294901760
    %v223 = vsub.f32 %v221, %v222
    %v224 = vand.u32 %v223, 4294901760
    %225 = vmatprep.subr.mxu0 %v224
    %v226 = vand.u32 %v70, 4294901760
    %v227 = vsub.f32 %v70, %v226
    %v228 = vand.u32 %v227, 4294901760
    %v229 = vsub.f32 %v227, %v228
    %v230 = vand.u32 %v229, 4294901760
    %231 = vmatpush1.msra.mxu0 %v230
    %v232 = vand.u32 %v69, 4294901760
    %v233 = vsub.f32 %v69, %v232
    %v234 = vand.u32 %v233, 4294901760
    %v235 = vsub.f32 %v233, %v234
    %v236 = vand.u32 %v235, 4294901760
    %237 = vmatprep.subr.mxu0 %v236
    %v238 = vand.u32 %v68, 4294901760
    %v239 = vsub.f32 %v68, %v238
    %v240 = vand.u32 %v239, 4294901760
    %v241 = vsub.f32 %v239, %v240
    %v242 = vand.u32 %v241, 4294901760
    %243 = vmatpush1.msra.mxu0 %v242
    %v244 = vand.u32 %v67, 4294901760
    %v245 = vsub.f32 %v67, %v244
    %v246 = vand.u32 %v245, 4294901760
    %v247 = vsub.f32 %v245, %v246
    %v248 = vand.u32 %v247, 4294901760
    %249 = vmatprep.subr.mxu0 %v248
    %v250 = vand.u32 %v66, 4294901760
    %v251 = vsub.f32 %v66, %v250
    %v252 = vand.u32 %v251, 4294901760
    %v253 = vsub.f32 %v251, %v252
    %v254 = vand.u32 %v253, 4294901760
    %255 = vmatpush1.msra.mxu0 %v254
    %v256 = vand.u32 %v65, 4294901760
    %v257 = vsub.f32 %v65, %v256
    %v258 = vand.u32 %v257, 4294901760
    %v259 = vsub.f32 %v257, %v258
    %v260 = vand.u32 %v259, 4294901760
    %261 = vmatprep.subr.mxu0 %v260
    %v262 = vand.u32 %v64, 4294901760
    %v263 = vsub.f32 %v64, %v262
    %v264 = vand.u32 %v263, 4294901760
    %v265 = vsub.f32 %v263, %v264
    %v266 = vand.u32 %v265, 4294901760
    %267 = vmatpush1.msra.mxu0 %v266
    %v268 = vand.u32 %v63, 4294901760
    %v269 = vsub.f32 %v63, %v268
    %v270 = vand.u32 %v269, 4294901760
    %v271 = vsub.f32 %v269, %v270
    %v272 = vand.u32 %v271, 4294901760
    %273 = vmatprep.subr.mxu0 %v272
    %v274 = vand.u32 %v62, 4294901760
    %v275 = vsub.f32 %v62, %v274
    %v276 = vand.u32 %v275, 4294901760
    %v277 = vsub.f32 %v275, %v276
    %v278 = vand.u32 %v277, 4294901760
    %279 = vmatpush1.msra.mxu0 %v278
    %v280 = vand.u32 %v61, 4294901760
    %v281 = vsub.f32 %v61, %v280
    %v282 = vand.u32 %v281, 4294901760
    %v283 = vsub.f32 %v281, %v282
    %v284 = vand.u32 %v283, 4294901760
    %285 = vmatprep.subr.mxu0 %v284
    %v286 = vand.u32 %v60, 4294901760
    %v287 = vsub.f32 %v60, %v286
    %v288 = vand.u32 %v287, 4294901760
    %v289 = vsub.f32 %v287, %v288
    %v290 = vand.u32 %v289, 4294901760
    %291 = vmatpush1.msra.mxu0 %v290
    %v292 = vand.u32 %v59, 4294901760
    %v293 = vsub.f32 %v59, %v292
    %v294 = vand.u32 %v293, 4294901760
    %v295 = vsub.f32 %v293, %v294
    %v296 = vand.u32 %v295, 4294901760
    %297 = vmatprep.subr.mxu0 %v296
    %v298 = vand.u32 %v58, 4294901760
    %v299 = vsub.f32 %v58, %v298
    %v300 = vand.u32 %v299, 4294901760
    %v301 = vsub.f32 %v299, %v300
    %v302 = vand.u32 %v301, 4294901760
    %303 = vmatpush1.msra.mxu0 %v302
    %v304 = vand.u32 %v57, 4294901760
    %v305 = vsub.f32 %v57, %v304
    %v306 = vand.u32 %v305, 4294901760
    %v307 = vsub.f32 %v305, %v306
    %v308 = vand.u32 %v307, 4294901760
    %309 = vmatprep.subr.mxu0 %v308
    %v310 = vand.u32 %v56, 4294901760
    %v311 = vsub.f32 %v56, %v310
    %v312 = vand.u32 %v311, 4294901760
    %v313 = vsub.f32 %v311, %v312
    %v314 = vand.u32 %v313, 4294901760
    %315 = vmatpush1.msra.mxu0 %v314
    %v316 = vand.u32 %v55, 4294901760
    %v317 = vsub.f32 %v55, %v316
    %v318 = vand.u32 %v317, 4294901760
    %v319 = vsub.f32 %v317, %v318
    %v320 = vand.u32 %v319, 4294901760
    %321 = vmatprep.subr.mxu0 %v320
    %v322 = vand.u32 %v54, 4294901760
    %v323 = vsub.f32 %v54, %v322
    %v324 = vand.u32 %v323, 4294901760
    %v325 = vsub.f32 %v323, %v324
    %v326 = vand.u32 %v325, 4294901760
    %327 = vmatpush1.msra.mxu0 %v326
    %v328 = vand.u32 %v53, 4294901760
    %v329 = vsub.f32 %v53, %v328
    %v330 = vand.u32 %v329, 4294901760
    %v331 = vsub.f32 %v329, %v330
    %v332 = vand.u32 %v331, 4294901760
    %333 = vmatprep.subr.mxu0 %v332
    %v334 = vand.u32 %v52, 4294901760
    %v335 = vsub.f32 %v52, %v334
    %v336 = vand.u32 %v335, 4294901760
    %v337 = vsub.f32 %v335, %v336
    %v338 = vand.u32 %v337, 4294901760
    %339 = vmatpush1.msra.mxu0 %v338
    %v340 = vand.u32 %v51, 4294901760
    %v341 = vsub.f32 %v51, %v340
    %v342 = vand.u32 %v341, 4294901760
    %v343 = vsub.f32 %v341, %v342
    %v344 = vand.u32 %v343, 4294901760
    %345 = vmatprep.subr.mxu0 %v344
    %v346 = vand.u32 %v50, 4294901760
    %v347 = vsub.f32 %v50, %v346
    %v348 = vand.u32 %v347, 4294901760
    %v349 = vsub.f32 %v347, %v348
    %v350 = vand.u32 %v349, 4294901760
    %351 = vmatpush1.msra.mxu0 %v350
    %v352 = vand.u32 %v49, 4294901760
    %v353 = vsub.f32 %v49, %v352
    %v354 = vand.u32 %v353, 4294901760
    %v355 = vsub.f32 %v353, %v354
    %v356 = vand.u32 %v355, 4294901760
    %357 = vmatprep.subr.mxu0 %v356
    %v358 = vand.u32 %v48, 4294901760
    %v359 = vsub.f32 %v48, %v358
    %v360 = vand.u32 %v359, 4294901760
    %v361 = vsub.f32 %v359, %v360
    %v362 = vand.u32 %v361, 4294901760
    %363 = vmatpush1.msra.mxu0 %v362
    %v364 = vand.u32 %v47, 4294901760
    %v365 = vsub.f32 %v47, %v364
    %v366 = vand.u32 %v365, 4294901760
    %v367 = vsub.f32 %v365, %v366
    %v368 = vand.u32 %v367, 4294901760
    %369 = vmatprep.subr.mxu0 %v368
    %v370 = vand.u32 %v46, 4294901760
    %v371 = vsub.f32 %v46, %v370
    %v372 = vand.u32 %v371, 4294901760
    %v373 = vsub.f32 %v371, %v372
    %v374 = vand.u32 %v373, 4294901760
    %375 = vmatpush1.msra.mxu0 %v374
    %v376 = vand.u32 %v45, 4294901760
    %v377 = vsub.f32 %v45, %v376
    %v378 = vand.u32 %v377, 4294901760
    %v379 = vsub.f32 %v377, %v378
    %v380 = vand.u32 %v379, 4294901760
    %381 = vmatprep.subr.mxu0 %v380
    %v382 = vand.u32 %v44, 4294901760
    %v383 = vsub.f32 %v44, %v382
    %v384 = vand.u32 %v383, 4294901760
    %v385 = vsub.f32 %v383, %v384
    %v386 = vand.u32 %v385, 4294901760
    %387 = vmatpush1.msra.mxu0 %v386
    %388 = vmatprep.subr.mxu0 0.0
    %389 = vmatpush2.msra.mxu0 0.0
    %390 = vmatprep.subr.mxu0 0.0
    %391 = vmatpush2.msra.mxu0 0.0
    %392 = vmatprep.subr.mxu0 0.0
    %393 = vmatpush2.msra.mxu0 0.0
    %394 = vmatprep.subr.mxu0 0.0
    %395 = vmatpush2.msra.mxu0 0.0
    %396 = vmatprep.subr.mxu0 0.0
    %397 = vmatpush2.msra.mxu0 0.0
    %398 = vmatprep.subr.mxu0 0.0
    %399 = vmatpush2.msra.mxu0 0.0
    %400 = vmatprep.subr.mxu0 0.0
    %401 = vmatpush2.msra.mxu0 0.0
    %402 = vmatprep.subr.mxu0 0.0
    %403 = vmatpush2.msra.mxu0 0.0
    %404 = vmatprep.subr.mxu0 0.0
    %405 = vmatpush2.msra.mxu0 0.0
    %406 = vmatprep.subr.mxu0 0.0
    %407 = vmatpush2.msra.mxu0 0.0
    %408 = vmatprep.subr.mxu0 0.0
    %409 = vmatpush2.msra.mxu0 0.0
    %410 = vmatprep.subr.mxu0 0.0
    %411 = vmatpush2.msra.mxu0 0.0
    %412 = vmatprep.subr.mxu0 0.0
    %413 = vmatpush2.msra.mxu0 0.0
    %414 = vmatprep.subr.mxu0 0.0
    %415 = vmatpush2.msra.mxu0 0.0
    %416 = vmatprep.subr.mxu0 0.0
    %417 = vmatpush2.msra.mxu0 0.0
    %418 = vmatprep.subr.mxu0 0.0
    %419 = vmatpush2.msra.mxu0 0.0
    %420 = vmatprep.mubr.f32.mxu0 0.0
    %v421 = vand.u32 %v43, 4294901760
    %422 = vmatmul.mubr.f32.gmra.mxu0 %v421
    %v423 = vpop.f32.mrf.mxu0
    %v424 = vadd.f32 %v192, %v423
    %v425 = vpop.f32.mrf.mxu0
    %v426 = vadd.f32 %v194, %v425
    %427 = vdwg.mxu0
    %v428 = vand.u32 %v75, 4294901760
    %v429 = vsub.f32 %v75, %v428
    %430 = vmatprep.subr.mxu0 %v429
    %v431 = vand.u32 %v74, 4294901760
    %v432 = vsub.f32 %v74, %v431
    %433 = vmatpush1.msra.mxu0 %v432
    %v434 = vand.u32 %v73, 4294901760
    %v435 = vsub.f32 %v73, %v434
    %436 = vmatprep.subr.mxu0 %v435
    %v437 = vand.u32 %v72, 4294901760
    %v438 = vsub.f32 %v72, %v437
    %439 = vmatpush1.msra.mxu0 %v438
    %v440 = vand.u32 %v71, 4294901760
    %v441 = vsub.f32 %v71, %v440
    %442 = vmatprep.subr.mxu0 %v441
    %v443 = vand.u32 %v70, 4294901760
    %v444 = vsub.f32 %v70, %v443
    %445 = vmatpush1.msra.mxu0 %v444
    %v446 = vand.u32 %v69, 4294901760
    %v447 = vsub.f32 %v69, %v446
    %448 = vmatprep.subr.mxu0 %v447
    %v449 = vand.u32 %v68, 4294901760
    %v450 = vsub.f32 %v68, %v449
    %451 = vmatpush1.msra.mxu0 %v450
    %v452 = vand.u32 %v67, 4294901760
    %v453 = vsub.f32 %v67, %v452
    %454 = vmatprep.subr.mxu0 %v453
    %v455 = vand.u32 %v66, 4294901760
    %v456 = vsub.f32 %v66, %v455
    %457 = vmatpush1.msra.mxu0 %v456
    %v458 = vand.u32 %v65, 4294901760
    %v459 = vsub.f32 %v65, %v458
    %460 = vmatprep.subr.mxu0 %v459
    %v461 = vand.u32 %v64, 4294901760
    %v462 = vsub.f32 %v64, %v461
    %463 = vmatpush1.msra.mxu0 %v462
    %v464 = vand.u32 %v63, 4294901760
    %v465 = vsub.f32 %v63, %v464
    %466 = vmatprep.subr.mxu0 %v465
    %v467 = vand.u32 %v62, 4294901760
    %v468 = vsub.f32 %v62, %v467
    %469 = vmatpush1.msra.mxu0 %v468
    %v470 = vand.u32 %v61, 4294901760
    %v471 = vsub.f32 %v61, %v470
    %472 = vmatprep.subr.mxu0 %v471
    %v473 = vand.u32 %v60, 4294901760
    %v474 = vsub.f32 %v60, %v473
    %475 = vmatpush1.msra.mxu0 %v474
    %v476 = vand.u32 %v59, 4294901760
    %v477 = vsub.f32 %v59, %v476
    %478 = vmatprep.subr.mxu0 %v477
    %v479 = vand.u32 %v58, 4294901760
    %v480 = vsub.f32 %v58, %v479
    %481 = vmatpush1.msra.mxu0 %v480
    %v482 = vand.u32 %v57, 4294901760
    %v483 = vsub.f32 %v57, %v482
    %484 = vmatprep.subr.mxu0 %v483
    %v485 = vand.u32 %v56, 4294901760
    %v486 = vsub.f32 %v56, %v485
    %487 = vmatpush1.msra.mxu0 %v486
    %v488 = vand.u32 %v55, 4294901760
    %v489 = vsub.f32 %v55, %v488
    %490 = vmatprep.subr.mxu0 %v489
    %v491 = vand.u32 %v54, 4294901760
    %v492 = vsub.f32 %v54, %v491
    %493 = vmatpush1.msra.mxu0 %v492
    %v494 = vand.u32 %v53, 4294901760
    %v495 = vsub.f32 %v53, %v494
    %496 = vmatprep.subr.mxu0 %v495
    %v497 = vand.u32 %v52, 4294901760
    %v498 = vsub.f32 %v52, %v497
    %499 = vmatpush1.msra.mxu0 %v498
    %v500 = vand.u32 %v51, 4294901760
    %v501 = vsub.f32 %v51, %v500
    %502 = vmatprep.subr.mxu0 %v501
    %v503 = vand.u32 %v50, 4294901760
    %v504 = vsub.f32 %v50, %v503
    %505 = vmatpush1.msra.mxu0 %v504
    %v506 = vand.u32 %v49, 4294901760
    %v507 = vsub.f32 %v49, %v506
    %508 = vmatprep.subr.mxu0 %v507
    %v509 = vand.u32 %v48, 4294901760
    %v510 = vsub.f32 %v48, %v509
    %511 = vmatpush1.msra.mxu0 %v510
    %v512 = vand.u32 %v47, 4294901760
    %v513 = vsub.f32 %v47, %v512
    %514 = vmatprep.subr.mxu0 %v513
    %v515 = vand.u32 %v46, 4294901760
    %v516 = vsub.f32 %v46, %v515
    %517 = vmatpush1.msra.mxu0 %v516
    %v518 = vand.u32 %v45, 4294901760
    %v519 = vsub.f32 %v45, %v518
    %520 = vmatprep.subr.mxu0 %v519
    %v521 = vand.u32 %v44, 4294901760
    %v522 = vsub.f32 %v44, %v521
    %523 = vmatpush1.msra.mxu0 %v522
    %524 = vmatprep.subr.mxu0 0.0
    %525 = vmatpush2.msra.mxu0 0.0
    %526 = vmatprep.subr.mxu0 0.0
    %527 = vmatpush2.msra.mxu0 0.0
    %528 = vmatprep.subr.mxu0 0.0
    %529 = vmatpush2.msra.mxu0 0.0
    %530 = vmatprep.subr.mxu0 0.0
    %531 = vmatpush2.msra.mxu0 0.0
    %532 = vmatprep.subr.mxu0 0.0
    %533 = vmatpush2.msra.mxu0 0.0
    %534 = vmatprep.subr.mxu0 0.0
    %535 = vmatpush2.msra.mxu0 0.0
    %536 = vmatprep.subr.mxu0 0.0
    %537 = vmatpush2.msra.mxu0 0.0
    %538 = vmatprep.subr.mxu0 0.0
    %539 = vmatpush2.msra.mxu0 0.0
    %540 = vmatprep.subr.mxu0 0.0
    %541 = vmatpush2.msra.mxu0 0.0
    %542 = vmatprep.subr.mxu0 0.0
    %543 = vmatpush2.msra.mxu0 0.0
    %544 = vmatprep.subr.mxu0 0.0
    %545 = vmatpush2.msra.mxu0 0.0
    %546 = vmatprep.subr.mxu0 0.0
    %547 = vmatpush2.msra.mxu0 0.0
    %548 = vmatprep.subr.mxu0 0.0
    %549 = vmatpush2.msra.mxu0 0.0
    %550 = vmatprep.subr.mxu0 0.0
    %551 = vmatpush2.msra.mxu0 0.0
    %552 = vmatprep.subr.mxu0 0.0
    %553 = vmatpush2.msra.mxu0 0.0
    %554 = vmatprep.subr.mxu0 0.0
    %555 = vmatpush2.msra.mxu0 0.0
    %556 = vmatprep.mubr.f32.mxu0 0.0
    %v557 = vand.u32 %v43, 4294901760
    %v558 = vsub.f32 %v43, %v557
    %559 = vmatmul.mubr.f32.gmra.mxu0 %v558
    %v560 = vpop.f32.mrf.mxu0
    %v561 = vadd.f32 %v424, %v560
    %v562 = vpop.f32.mrf.mxu0
    %v563 = vadd.f32 %v426, %v562
    %564 = vdwg.mxu0
    %v565 = vand.u32 %v75, 4294901760
    %566 = vmatprep.subr.mxu0 %v565
    %v567 = vand.u32 %v74, 4294901760
    %568 = vmatpush1.msra.mxu0 %v567
    %v569 = vand.u32 %v73, 4294901760
    %570 = vmatprep.subr.mxu0 %v569
    %v571 = vand.u32 %v72, 4294901760
    %572 = vmatpush1.msra.mxu0 %v571
    %v573 = vand.u32 %v71, 4294901760
    %574 = vmatprep.subr.mxu0 %v573
    %v575 = vand.u32 %v70, 4294901760
    %576 = vmatpush1.msra.mxu0 %v575
    %v577 = vand.u32 %v69, 4294901760
    %578 = vmatprep.subr.mxu0 %v577
    %v579 = vand.u32 %v68, 4294901760
    %580 = vmatpush1.msra.mxu0 %v579
    %v581 = vand.u32 %v67, 4294901760
    %582 = vmatprep.subr.mxu0 %v581
    %v583 = vand.u32 %v66, 4294901760
    %584 = vmatpush1.msra.mxu0 %v583
    %v585 = vand.u32 %v65, 4294901760
    %586 = vmatprep.subr.mxu0 %v585
    %v587 = vand.u32 %v64, 4294901760
    %588 = vmatpush1.msra.mxu0 %v587
    %v589 = vand.u32 %v63, 4294901760
    %590 = vmatprep.subr.mxu0 %v589
    %v591 = vand.u32 %v62, 4294901760
    %592 = vmatpush1.msra.mxu0 %v591
    %v593 = vand.u32 %v61, 4294901760
    %594 = vmatprep.subr.mxu0 %v593
    %v595 = vand.u32 %v60, 4294901760
    %596 = vmatpush1.msra.mxu0 %v595
    %v597 = vand.u32 %v59, 4294901760
    %598 = vmatprep.subr.mxu0 %v597
    %v599 = vand.u32 %v58, 4294901760
    %600 = vmatpush1.msra.mxu0 %v599
    %v601 = vand.u32 %v57, 4294901760
    %602 = vmatprep.subr.mxu0 %v601
    %v603 = vand.u32 %v56, 4294901760
    %604 = vmatpush1.msra.mxu0 %v603
    %v605 = vand.u32 %v55, 4294901760
    %606 = vmatprep.subr.mxu0 %v605
    %v607 = vand.u32 %v54, 4294901760
    %608 = vmatpush1.msra.mxu0 %v607
    %v609 = vand.u32 %v53, 4294901760
    %610 = vmatprep.subr.mxu0 %v609
    %v611 = vand.u32 %v52, 4294901760
    %612 = vmatpush1.msra.mxu0 %v611
    %v613 = vand.u32 %v51, 4294901760
    %614 = vmatprep.subr.mxu0 %v613
    %v615 = vand.u32 %v50, 4294901760
    %616 = vmatpush1.msra.mxu0 %v615
    %v617 = vand.u32 %v49, 4294901760
    %618 = vmatprep.subr.mxu0 %v617
    %v619 = vand.u32 %v48, 4294901760
    %620 = vmatpush1.msra.mxu0 %v619
    %v621 = vand.u32 %v47, 4294901760
    %622 = vmatprep.subr.mxu0 %v621
    %v623 = vand.u32 %v46, 4294901760
    %624 = vmatpush1.msra.mxu0 %v623
    %v625 = vand.u32 %v45, 4294901760
    %626 = vmatprep.subr.mxu0 %v625
    %v627 = vand.u32 %v44, 4294901760
    %628 = vmatpush1.msra.mxu0 %v627
    %629 = vmatprep.subr.mxu0 0.0
    %630 = vmatpush2.msra.mxu0 0.0
    %631 = vmatprep.subr.mxu0 0.0
    %632 = vmatpush2.msra.mxu0 0.0
    %633 = vmatprep.subr.mxu0 0.0
    %634 = vmatpush2.msra.mxu0 0.0
    %635 = vmatprep.subr.mxu0 0.0
    %636 = vmatpush2.msra.mxu0 0.0
    %637 = vmatprep.subr.mxu0 0.0
    %638 = vmatpush2.msra.mxu0 0.0
    %639 = vmatprep.subr.mxu0 0.0
    %640 = vmatpush2.msra.mxu0 0.0
    %641 = vmatprep.subr.mxu0 0.0
    %642 = vmatpush2.msra.mxu0 0.0
    %643 = vmatprep.subr.mxu0 0.0
    %644 = vmatpush2.msra.mxu0 0.0
    %645 = vmatprep.subr.mxu0 0.0
    %646 = vmatpush2.msra.mxu0 0.0
    %647 = vmatprep.subr.mxu0 0.0
    %648 = vmatpush2.msra.mxu0 0.0
    %649 = vmatprep.subr.mxu0 0.0
    %650 = vmatpush2.msra.mxu0 0.0
    %651 = vmatprep.subr.mxu0 0.0
    %652 = vmatpush2.msra.mxu0 0.0
    %653 = vmatprep.subr.mxu0 0.0
    %654 = vmatpush2.msra.mxu0 0.0
    %655 = vmatprep.subr.mxu0 0.0
    %656 = vmatpush2.msra.mxu0 0.0
    %657 = vmatprep.subr.mxu0 0.0
    %658 = vmatpush2.msra.mxu0 0.0
    %659 = vmatprep.subr.mxu0 0.0
    %660 = vmatpush2.msra.mxu0 0.0
    %661 = vmatprep.mubr.f32.mxu0 0.0
    %v662 = vand.u32 %v43, 4294901760
    %v663 = vsub.f32 %v43, %v662
    %v664 = vand.u32 %v663, 4294901760
    %665 = vmatmul.mubr.f32.gmra.mxu0 %v664
    %v666 = vpop.f32.mrf.mxu0
    %v667 = vadd.f32 %v561, %v666
    %v668 = vpop.f32.mrf.mxu0
    %v669 = vadd.f32 %v563, %v668
    %670 = vdwg.mxu0
    %v671 = vand.u32 %v75, 4294901760
    %v672 = vsub.f32 %v75, %v671
    %v673 = vand.u32 %v672, 4294901760
    %674 = vmatprep.subr.mxu0 %v673
    %v675 = vand.u32 %v74, 4294901760
    %v676 = vsub.f32 %v74, %v675
    %v677 = vand.u32 %v676, 4294901760
    %678 = vmatpush1.msra.mxu0 %v677
    %v679 = vand.u32 %v73, 4294901760
    %v680 = vsub.f32 %v73, %v679
    %v681 = vand.u32 %v680, 4294901760
    %682 = vmatprep.subr.mxu0 %v681
    %v683 = vand.u32 %v72, 4294901760
    %v684 = vsub.f32 %v72, %v683
    %v685 = vand.u32 %v684, 4294901760
    %686 = vmatpush1.msra.mxu0 %v685
    %v687 = vand.u32 %v71, 4294901760
    %v688 = vsub.f32 %v71, %v687
    %v689 = vand.u32 %v688, 4294901760
    %690 = vmatprep.subr.mxu0 %v689
    %v691 = vand.u32 %v70, 4294901760
    %v692 = vsub.f32 %v70, %v691
    %v693 = vand.u32 %v692, 4294901760
    %694 = vmatpush1.msra.mxu0 %v693
    %v695 = vand.u32 %v69, 4294901760
    %v696 = vsub.f32 %v69, %v695
    %v697 = vand.u32 %v696, 4294901760
    %698 = vmatprep.subr.mxu0 %v697
    %v699 = vand.u32 %v68, 4294901760
    %v700 = vsub.f32 %v68, %v699
    %v701 = vand.u32 %v700, 4294901760
    %702 = vmatpush1.msra.mxu0 %v701
    %v703 = vand.u32 %v67, 4294901760
    %v704 = vsub.f32 %v67, %v703
    %v705 = vand.u32 %v704, 4294901760
    %706 = vmatprep.subr.mxu0 %v705
    %v707 = vand.u32 %v66, 4294901760
    %v708 = vsub.f32 %v66, %v707
    %v709 = vand.u32 %v708, 4294901760
    %710 = vmatpush1.msra.mxu0 %v709
    %v711 = vand.u32 %v65, 4294901760
    %v712 = vsub.f32 %v65, %v711
    %v713 = vand.u32 %v712, 4294901760
    %714 = vmatprep.subr.mxu0 %v713
    %v715 = vand.u32 %v64, 4294901760
    %v716 = vsub.f32 %v64, %v715
    %v717 = vand.u32 %v716, 4294901760
    %718 = vmatpush1.msra.mxu0 %v717
    %v719 = vand.u32 %v63, 4294901760
    %v720 = vsub.f32 %v63, %v719
    %v721 = vand.u32 %v720, 4294901760
    %722 = vmatprep.subr.mxu0 %v721
    %v723 = vand.u32 %v62, 4294901760
    %v724 = vsub.f32 %v62, %v723
    %v725 = vand.u32 %v724, 4294901760
    %726 = vmatpush1.msra.mxu0 %v725
    %v727 = vand.u32 %v61, 4294901760
    %v728 = vsub.f32 %v61, %v727
    %v729 = vand.u32 %v728, 4294901760
    %730 = vmatprep.subr.mxu0 %v729
    %v731 = vand.u32 %v60, 4294901760
    %v732 = vsub.f32 %v60, %v731
    %v733 = vand.u32 %v732, 4294901760
    %734 = vmatpush1.msra.mxu0 %v733
    %v735 = vand.u32 %v59, 4294901760
    %v736 = vsub.f32 %v59, %v735
    %v737 = vand.u32 %v736, 4294901760
    %738 = vmatprep.subr.mxu0 %v737
    %v739 = vand.u32 %v58, 4294901760
    %v740 = vsub.f32 %v58, %v739
    %v741 = vand.u32 %v740, 4294901760
    %742 = vmatpush1.msra.mxu0 %v741
    %v743 = vand.u32 %v57, 4294901760
    %v744 = vsub.f32 %v57, %v743
    %v745 = vand.u32 %v744, 4294901760
    %746 = vmatprep.subr.mxu0 %v745
    %v747 = vand.u32 %v56, 4294901760
    %v748 = vsub.f32 %v56, %v747
    %v749 = vand.u32 %v748, 4294901760
    %750 = vmatpush1.msra.mxu0 %v749
    %v751 = vand.u32 %v55, 4294901760
    %v752 = vsub.f32 %v55, %v751
    %v753 = vand.u32 %v752, 4294901760
    %754 = vmatprep.subr.mxu0 %v753
    %v755 = vand.u32 %v54, 4294901760
    %v756 = vsub.f32 %v54, %v755
    %v757 = vand.u32 %v756, 4294901760
    %758 = vmatpush1.msra.mxu0 %v757
    %v759 = vand.u32 %v53, 4294901760
    %v760 = vsub.f32 %v53, %v759
    %v761 = vand.u32 %v760, 4294901760
    %762 = vmatprep.subr.mxu0 %v761
    %v763 = vand.u32 %v52, 4294901760
    %v764 = vsub.f32 %v52, %v763
    %v765 = vand.u32 %v764, 4294901760
    %766 = vmatpush1.msra.mxu0 %v765
    %v767 = vand.u32 %v51, 4294901760
    %v768 = vsub.f32 %v51, %v767
    %v769 = vand.u32 %v768, 4294901760
    %770 = vmatprep.subr.mxu0 %v769
    %v771 = vand.u32 %v50, 4294901760
    %v772 = vsub.f32 %v50, %v771
    %v773 = vand.u32 %v772, 4294901760
    %774 = vmatpush1.msra.mxu0 %v773
    %v775 = vand.u32 %v49, 4294901760
    %v776 = vsub.f32 %v49, %v775
    %v777 = vand.u32 %v776, 4294901760
    %778 = vmatprep.subr.mxu0 %v777
    %v779 = vand.u32 %v48, 4294901760
    %v780 = vsub.f32 %v48, %v779
    %v781 = vand.u32 %v780, 4294901760
    %782 = vmatpush1.msra.mxu0 %v781
    %v783 = vand.u32 %v47, 4294901760
    %v784 = vsub.f32 %v47, %v783
    %v785 = vand.u32 %v784, 4294901760
    %786 = vmatprep.subr.mxu0 %v785
    %v787 = vand.u32 %v46, 4294901760
    %v788 = vsub.f32 %v46, %v787
    %v789 = vand.u32 %v788, 4294901760
    %790 = vmatpush1.msra.mxu0 %v789
    %v791 = vand.u32 %v45, 4294901760
    %v792 = vsub.f32 %v45, %v791
    %v793 = vand.u32 %v792, 4294901760
    %794 = vmatprep.subr.mxu0 %v793
    %v795 = vand.u32 %v44, 4294901760
    %v796 = vsub.f32 %v44, %v795
    %v797 = vand.u32 %v796, 4294901760
    %798 = vmatpush1.msra.mxu0 %v797
    %799 = vmatprep.subr.mxu0 0.0
    %800 = vmatpush2.msra.mxu0 0.0
    %801 = vmatprep.subr.mxu0 0.0
    %802 = vmatpush2.msra.mxu0 0.0
    %803 = vmatprep.subr.mxu0 0.0
    %804 = vmatpush2.msra.mxu0 0.0
    %805 = vmatprep.subr.mxu0 0.0
    %806 = vmatpush2.msra.mxu0 0.0
    %807 = vmatprep.subr.mxu0 0.0
    %808 = vmatpush2.msra.mxu0 0.0
    %809 = vmatprep.subr.mxu0 0.0
    %810 = vmatpush2.msra.mxu0 0.0
    %811 = vmatprep.subr.mxu0 0.0
    %812 = vmatpush2.msra.mxu0 0.0
    %813 = vmatprep.subr.mxu0 0.0
    %814 = vmatpush2.msra.mxu0 0.0
    %815 = vmatprep.subr.mxu0 0.0
    %816 = vmatpush2.msra.mxu0 0.0
    %817 = vmatprep.subr.mxu0 0.0
    %818 = vmatpush2.msra.mxu0 0.0
    %819 = vmatprep.subr.mxu0 0.0
    %820 = vmatpush2.msra.mxu0 0.0
    %821 = vmatprep.subr.mxu0 0.0
    %822 = vmatpush2.msra.mxu0 0.0
    %823 = vmatprep.subr.mxu0 0.0
    %824 = vmatpush2.msra.mxu0 0.0
    %825 = vmatprep.subr.mxu0 0.0
    %826 = vmatpush2.msra.mxu0 0.0
    %827 = vmatprep.subr.mxu0 0.0
    %828 = vmatpush2.msra.mxu0 0.0
    %829 = vmatprep.subr.mxu0 0.0
    %830 = vmatpush2.msra.mxu0 0.0
    %831 = vmatprep.mubr.f32.mxu0 0.0
    %v832 = vand.u32 %v43, 4294901760
    %833 = vmatmul.mubr.f32.gmra.mxu0 %v832
    %v834 = vpop.f32.mrf.mxu0
    %v835 = vadd.f32 %v667, %v834
    %v836 = vpop.f32.mrf.mxu0
    %v837 = vadd.f32 %v669, %v836
    %838 = vdwg.mxu0
    %v839 = vand.u32 %v75, 4294901760
    %840 = vmatprep.subr.mxu0 %v839
    %v841 = vand.u32 %v74, 4294901760
    %842 = vmatpush1.msra.mxu0 %v841
    %v843 = vand.u32 %v73, 4294901760
    %844 = vmatprep.subr.mxu0 %v843
    %v845 = vand.u32 %v72, 4294901760
    %846 = vmatpush1.msra.mxu0 %v845
    %v847 = vand.u32 %v71, 4294901760
    %848 = vmatprep.subr.mxu0 %v847
    %v849 = vand.u32 %v70, 4294901760
    %850 = vmatpush1.msra.mxu0 %v849
    %v851 = vand.u32 %v69, 4294901760
    %852 = vmatprep.subr.mxu0 %v851
    %v853 = vand.u32 %v68, 4294901760
    %854 = vmatpush1.msra.mxu0 %v853
    %v855 = vand.u32 %v67, 4294901760
    %856 = vmatprep.subr.mxu0 %v855
    %v857 = vand.u32 %v66, 4294901760
    %858 = vmatpush1.msra.mxu0 %v857
    %v859 = vand.u32 %v65, 4294901760
    %860 = vmatprep.subr.mxu0 %v859
    %v861 = vand.u32 %v64, 4294901760
    %862 = vmatpush1.msra.mxu0 %v861
    %v863 = vand.u32 %v63, 4294901760
    %864 = vmatprep.subr.mxu0 %v863
    %v865 = vand.u32 %v62, 4294901760
    %866 = vmatpush1.msra.mxu0 %v865
    %v867 = vand.u32 %v61, 4294901760
    %868 = vmatprep.subr.mxu0 %v867
    %v869 = vand.u32 %v60, 4294901760
    %870 = vmatpush1.msra.mxu0 %v869
    %v871 = vand.u32 %v59, 4294901760
    %872 = vmatprep.subr.mxu0 %v871
    %v873 = vand.u32 %v58, 4294901760
    %874 = vmatpush1.msra.mxu0 %v873
    %v875 = vand.u32 %v57, 4294901760
    %876 = vmatprep.subr.mxu0 %v875
    %v877 = vand.u32 %v56, 4294901760
    %878 = vmatpush1.msra.mxu0 %v877
    %v879 = vand.u32 %v55, 4294901760
    %880 = vmatprep.subr.mxu0 %v879
    %v881 = vand.u32 %v54, 4294901760
    %882 = vmatpush1.msra.mxu0 %v881
    %v883 = vand.u32 %v53, 4294901760
    %884 = vmatprep.subr.mxu0 %v883
    %v885 = vand.u32 %v52, 4294901760
    %886 = vmatpush1.msra.mxu0 %v885
    %v887 = vand.u32 %v51, 4294901760
    %888 = vmatprep.subr.mxu0 %v887
    %v889 = vand.u32 %v50, 4294901760
    %890 = vmatpush1.msra.mxu0 %v889
    %v891 = vand.u32 %v49, 4294901760
    %892 = vmatprep.subr.mxu0 %v891
    %v893 = vand.u32 %v48, 4294901760
    %894 = vmatpush1.msra.mxu0 %v893
    %v895 = vand.u32 %v47, 4294901760
    %896 = vmatprep.subr.mxu0 %v895
    %v897 = vand.u32 %v46, 4294901760
    %898 = vmatpush1.msra.mxu0 %v897
    %v899 = vand.u32 %v45, 4294901760
    %900 = vmatprep.subr.mxu0 %v899
    %v901 = vand.u32 %v44, 4294901760
    %902 = vmatpush1.msra.mxu0 %v901
    %903 = vmatprep.subr.mxu0 0.0
    %904 = vmatpush2.msra.mxu0 0.0
    %905 = vmatprep.subr.mxu0 0.0
    %906 = vmatpush2.msra.mxu0 0.0
    %907 = vmatprep.subr.mxu0 0.0
    %908 = vmatpush2.msra.mxu0 0.0
    %909 = vmatprep.subr.mxu0 0.0
    %910 = vmatpush2.msra.mxu0 0.0
    %911 = vmatprep.subr.mxu0 0.0
    %912 = vmatpush2.msra.mxu0 0.0
    %913 = vmatprep.subr.mxu0 0.0
    %914 = vmatpush2.msra.mxu0 0.0
    %915 = vmatprep.subr.mxu0 0.0
    %916 = vmatpush2.msra.mxu0 0.0
    %917 = vmatprep.subr.mxu0 0.0
    %918 = vmatpush2.msra.mxu0 0.0
    %919 = vmatprep.subr.mxu0 0.0
    %920 = vmatpush2.msra.mxu0 0.0
    %921 = vmatprep.subr.mxu0 0.0
    %922 = vmatpush2.msra.mxu0 0.0
    %923 = vmatprep.subr.mxu0 0.0
    %924 = vmatpush2.msra.mxu0 0.0
    %925 = vmatprep.subr.mxu0 0.0
    %926 = vmatpush2.msra.mxu0 0.0
    %927 = vmatprep.subr.mxu0 0.0
    %928 = vmatpush2.msra.mxu0 0.0
    %929 = vmatprep.subr.mxu0 0.0
    %930 = vmatpush2.msra.mxu0 0.0
    %931 = vmatprep.subr.mxu0 0.0
    %932 = vmatpush2.msra.mxu0 0.0
    %933 = vmatprep.subr.mxu0 0.0
    %934 = vmatpush2.msra.mxu0 0.0
    %935 = vmatprep.mubr.f32.mxu0 0.0
    %v936 = vand.u32 %v43, 4294901760
    %937 = vmatmul.mubr.f32.gmra.mxu0 %v936
    %v938 = vpop.f32.mrf.mxu0
    %v939 = vadd.f32 %v835, %v938
    %v940 = vpop.f32.mrf.mxu0
    %v941 = vadd.f32 %v837, %v940
    %942 = vdwg.mxu0
    %v943 = vlaneseq
    %v944 = vand.u32 %v943, 127
    %v945 = vadd.s32 %v944, 128
    %v946 = vand.u32 %v944, 31
    %v947 = vand.u32 %v945, 31
    %vm948 = vcmp.eq.s32.totalorder %v946, 0
    %vm949 = vcmp.eq.s32.totalorder %v947, 0
    %v950 = vand.u32 2147483647, %v939
    %vm951 = vcmp.le.f32.partialorder %v950, 0.7853982
    %vm952 = vcmp.lt.s32.totalorder %v939, 0
    %v953 = vand.u32 %v939, 2139095040
    %v954 = vshrl.u32 %v953, 23
    %v955 = vsub.s32 %v954, 127
    %v956 = vand.u32 2147483647, %v939
    %v957 = vand.u32 %v956, 8388607
    %v958 = vor.u32 %v957, 8388608
    %v959 = vsub.s32 0, %v958
    %v960 = vadd.s32 %v955, 1
    %vm961 = vcmp.gt.s32.totalorder %v960, 0
    %v962 = vsel %vm961, %v960, 0
    %v963 = vshrl.u32 %v962, 5
    %v964 = vand.u32 %v962, 31
    %v965 = vsub.s32 32, %v964
    %v966 = vshrl.u32 683565275, %v965
    %v967 = vshll.u32 683565275, %v964
    %v968 = vshrl.u32 2475754826, %v965
    %v969 = vor.u32 %v967, %v968
    %v970 = vshll.u32 2475754826, %v964
    %v971 = vshrl.u32 2131351028, %v965
    %v972 = vor.u32 %v970, %v971
    %v973 = vshll.u32 2131351028, %v964
    %v974 = vshrl.u32 2102212464, %v965
    %v975 = vor.u32 %v973, %v974
    %v976 = vshll.u32 2102212464, %v964
    %v977 = vshrl.u32 920167782, %v965
    %v978 = vor.u32 %v976, %v977
    %v979 = vshll.u32 920167782, %v964
    %v980 = vshrl.u32 1326507024, %v965
    %v981 = vor.u32 %v979, %v980
    %vm982 = vcmp.lt.s32.totalorder %v963, 1
    %vm983 = vcmp.lt.s32.totalorder %v963, 2
    %vm984 = vcmp.lt.s32.totalorder %v963, 3
    %vm985 = vcmp.lt.s32.totalorder %v963, 4
    %v986 = vsel %vm982, %v966, %v969
    %v987 = vsel %vm985, %v975, 2102212464
    %v988 = vsel %vm984, %v972, %v987
    %v989 = vsel %vm983, %v986, %v988
    %v990 = vsel %vm982, %v969, %v972
    %v991 = vsel %vm985, %v978, 920167782
    %v992 = vsel %vm984, %v975, %v991
    %v993 = vsel %vm983, %v990, %v992
    %v994 = vsel %vm982, %v972, %v975
    %v995 = vsel %vm985, %v981, 1326507024
    %v996 = vsel %vm984, %v978, %v995
    %v997 = vsel %vm983, %v994, %v996
    %v998 = vshll.u32 %v958, 8
    %v999 = vmul.u32.u64.compose %v998, %v997
    %v1000 = vextract.low.u32 %v999
    %v1001 = vextract.high.u32 %v999
    %v1002 = vmul.u32.u64.compose %v998, %v993
    %v1003 = vextract.low.u32 %v1002
    %v1004 = vextract.high.u32 %v1002
    %v1005 = vmul.u32 %v998, %v989
    %v1006 = vadd.s32 %v1001, %v1003
    %vm1007 = vc.u32 %v1001, %v1003
    %v1008 = vadd.s32 %v1004, 1
    %v1009 = vsel %vm1007, %v1008, %v1004
    %v1010 = vadd.s32 %v1005, %v1009
    %v1011 = vadd.s32 %v1010, 536870912
    %v1012 = vshrl.u32 %v1011, 30
    %v1013 = vshll.u32 %v1012, 30
    %v1014 = vsub.s32 %v1010, %v1013
    %vm1015 = vcmp.lt.s32.totalorder %v1014, 0
    %v1016 = vsub.s32 0, %v1014
    %v1017 = vsel %vm1015, %v1016, %v1014
    %v1018 = vclz %v1017
    %v1019 = vsub.s32 %v1018, 2
    %vm1020 = vcmp.gt.s32.totalorder 0, %v1019
    %v1021 = vsel %vm1020, 0, %v1019
    %v1022 = vsub.s32 32, %v1021
    %v1023 = vshll.u32 %v1014, %v1021
    %v1024 = vshrl.u32 %v1006, %v1022
    %v1025 = vor.u32 %v1023, %v1024
    %v1026 = vsub.s32 4294967266, %v1021
    %v1027 = vadd.s32 %v1026, 127
    %v1028 = vshll.u32 %v1027, 23
    %v1029 = vor.u32 4788187, %v1028
    %v1030 = vand.u32 2147483647, %v1029
    %v1032 = vcvt.s32.f32 %v1025
    %v1033 = vmul.f32 %v1032, %v1030
    %v1034 = vxor.u32 %v1033, 2147483648
    %v1035 = vsel %vm952, %v1034, %v1033
    %v1036 = vsub.s32 4, %v1012
    %v1037 = vsel %vm952, %v1036, %v1012
    %v1038 = vsel %vm951, %v939, %v1035
    %v1039 = vsel %vm951, 0, %v1037
    %v1040 = vcosq.f32.pop %v1038
    %v1041 = vsinq.f32.pop %v1038
    %vm1042 = vweird.f32 %v939
    %v1043 = vadd.s32 %v1039, 3
    %v1044 = vand.u32 %v1043, 3
    %vm1045 = vcmp.lt.s32.totalorder %v1044, 2
    %vm1046 = vcmp.eq.s32.totalorder %v1044, 0
    %v1047 = vxor.u32 %v1041, 2147483648
    %v1048 = vsel %vm1046, %v1040, %v1047
    %vm1049 = vcmp.eq.s32.totalorder %v1044, 2
    %v1050 = vxor.u32 %v1040, 2147483648
    %v1051 = vsel %vm1049, %v1050, %v1041
    %v1052 = vsel %vm1045, %v1048, %v1051
    %v1053 = vsel %vm1042, nan, %v1052
    %v1054 = vand.u32 2147483647, %v941
    %vm1055 = vcmp.le.f32.partialorder %v1054, 0.7853982
    %vm1056 = vcmp.lt.s32.totalorder %v941, 0
    %v1057 = vand.u32 %v941, 2139095040
    %v1058 = vshrl.u32 %v1057, 23
    %v1059 = vsub.s32 %v1058, 127
    %v1060 = vand.u32 2147483647, %v941
    %v1061 = vand.u32 %v1060, 8388607
    %v1062 = vor.u32 %v1061, 8388608
    %v1063 = vsub.s32 0, %v1062
    %v1064 = vadd.s32 %v1059, 1
    %vm1065 = vcmp.gt.s32.totalorder %v1064, 0
    %v1066 = vsel %vm1065, %v1064, 0
    %v1067 = vshrl.u32 %v1066, 5
    %v1068 = vand.u32 %v1066, 31
    %v1069 = vsub.s32 32, %v1068
    %v1070 = vshrl.u32 683565275, %v1069
    %v1071 = vshll.u32 683565275, %v1068
    %v1072 = vshrl.u32 2475754826, %v1069
    %v1073 = vor.u32 %v1071, %v1072
    %v1074 = vshll.u32 2475754826, %v1068
    %v1075 = vshrl.u32 2131351028, %v1069
    %v1076 = vor.u32 %v1074, %v1075
    %v1077 = vshll.u32 2131351028, %v1068
    %v1078 = vshrl.u32 2102212464, %v1069
    %v1079 = vor.u32 %v1077, %v1078
    %v1080 = vshll.u32 2102212464, %v1068
    %v1081 = vshrl.u32 920167782, %v1069
    %v1082 = vor.u32 %v1080, %v1081
    %v1083 = vshll.u32 920167782, %v1068
    %v1084 = vshrl.u32 1326507024, %v1069
    %v1085 = vor.u32 %v1083, %v1084
    %vm1086 = vcmp.lt.s32.totalorder %v1067, 1
    %vm1087 = vcmp.lt.s32.totalorder %v1067, 2
    %vm1088 = vcmp.lt.s32.totalorder %v1067, 3
    %vm1089 = vcmp.lt.s32.totalorder %v1067, 4
    %v1090 = vsel %vm1086, %v1070, %v1073
    %v1091 = vsel %vm1089, %v1079, 2102212464
    %v1092 = vsel %vm1088, %v1076, %v1091
    %v1093 = vsel %vm1087, %v1090, %v1092
    %v1094 = vsel %vm1086, %v1073, %v1076
    %v1095 = vsel %vm1089, %v1082, 920167782
    %v1096 = vsel %vm1088, %v1079, %v1095
    %v1097 = vsel %vm1087, %v1094, %v1096
    %v1098 = vsel %vm1086, %v1076, %v1079
    %v1099 = vsel %vm1089, %v1085, 1326507024
    %v1100 = vsel %vm1088, %v1082, %v1099
    %v1101 = vsel %vm1087, %v1098, %v1100
    %v1102 = vshll.u32 %v1062, 8
    %v1103 = vmul.u32.u64.compose %v1102, %v1101
    %v1104 = vextract.low.u32 %v1103
    %v1105 = vextract.high.u32 %v1103
    %v1106 = vmul.u32.u64.compose %v1102, %v1097
    %v1107 = vextract.low.u32 %v1106
    %v1108 = vextract.high.u32 %v1106
    %v1109 = vmul.u32 %v1102, %v1093
    %v1110 = vadd.s32 %v1105, %v1107
    %vm1111 = vc.u32 %v1105, %v1107
    %v1112 = vadd.s32 %v1108, 1
    %v1113 = vsel %vm1111, %v1112, %v1108
    %v1114 = vadd.s32 %v1109, %v1113
    %v1115 = vadd.s32 %v1114, 536870912
    %v1116 = vshrl.u32 %v1115, 30
    %v1117 = vshll.u32 %v1116, 30
    %v1118 = vsub.s32 %v1114, %v1117
    %vm1119 = vcmp.lt.s32.totalorder %v1118, 0
    %v1120 = vsub.s32 0, %v1118
    %v1121 = vsel %vm1119, %v1120, %v1118
    %v1122 = vclz %v1121
    %v1123 = vsub.s32 %v1122, 2
    %vm1124 = vcmp.gt.s32.totalorder 0, %v1123
    %v1125 = vsel %vm1124, 0, %v1123
    %v1126 = vsub.s32 32, %v1125
    %v1127 = vshll.u32 %v1118, %v1125
    %v1128 = vshrl.u32 %v1110, %v1126
    %v1129 = vor.u32 %v1127, %v1128
    %v1130 = vsub.s32 4294967266, %v1125
    %v1131 = vadd.s32 %v1130, 127
    %v1132 = vshll.u32 %v1131, 23
    %v1133 = vor.u32 4788187, %v1132
    %v1134 = vand.u32 2147483647, %v1133
    %v1136 = vcvt.s32.f32 %v1129
    %v1137 = vmul.f32 %v1136, %v1134
    %v1138 = vxor.u32 %v1137, 2147483648
    %v1139 = vsel %vm1056, %v1138, %v1137
    %v1140 = vsub.s32 4, %v1116
    %v1141 = vsel %vm1056, %v1140, %v1116
    %v1142 = vsel %vm1055, %v941, %v1139
    %v1143 = vsel %vm1055, 0, %v1141
    %v1144 = vcosq.f32.pop %v1142
    %v1145 = vsinq.f32.pop %v1142
    %vm1146 = vweird.f32 %v941
    %v1147 = vadd.s32 %v1143, 3
    %v1148 = vand.u32 %v1147, 3
    %vm1149 = vcmp.lt.s32.totalorder %v1148, 2
    %vm1150 = vcmp.eq.s32.totalorder %v1148, 0
    %v1151 = vxor.u32 %v1145, 2147483648
    %v1152 = vsel %vm1150, %v1144, %v1151
    %vm1153 = vcmp.eq.s32.totalorder %v1148, 2
    %v1154 = vxor.u32 %v1144, 2147483648
    %v1155 = vsel %vm1153, %v1154, %v1145
    %v1156 = vsel %vm1149, %v1152, %v1155
    %v1157 = vsel %vm1146, nan, %v1156
    %v1158 = vsel %vm948, 1, 0
    %v1159 = vsel %vm949, 1, 0
    %vm1160 = vcmp.eq.s32.totalorder %v1158, 1
    %vm1161 = vcmp.eq.s32.totalorder %v1159, 1
    %v1162 = vsel %vm1160, %v939, %v1053
    %v1163 = vsel %vm1161, %v941, %v1157
    %v1166 = vcombine.low %v1162, %v1163
    %v1167 = vcombine.high %v1162, %v1163
    %v1169 = vunpack.c.l.s4 1983009808
    %v1170 = vunpack.c.0.s8 %v1169
    %v1171 = vlaneseq
    %v1172 = vshrl.u32 %v1171, 7
    %v1173 = vsub.s32 %v1170, %v1172
    %v1174 = vrot.slane %v1166, %v1173
    %v1176 = vunpack.c.l.s4 1983009808
    %v1177 = vunpack.c.0.s8 %v1176
    %v1178 = vlaneseq
    %v1179 = vshrl.u32 %v1178, 7
    %v1180 = vsub.s32 %v1177, %v1179
    %v1181 = vrot.slane %v1167, %v1180
    %v1182 = vcombine.high %v1174, %v1174
    %v1183 = vcombine.high %v1181, %v1181
    %1188 = vst [vmem:[#allocation7] sm:$0xf] %v1174
    %1189 = vst [vmem:[#allocation7 + $0x4] sm:$0xf] %v1182
    %1190 = vst [vmem:[#allocation7 + $0x8] sm:$0xf] %v1181
    %1191 = vst [vmem:[#allocation7 + $0xc] sm:$0xf] %v1183
    // Predicated region
    $region22: #{tpu_custom_call.1} parent=1 // pred_check
      _
    $region23: #{tpu_custom_call.1} parent=1 // pred_check_branch
      %1193 = sbr.rel (0) target = $region25
    $region24: #{tpu_custom_call.1} parent=1 // pred_region
      %s1195 = ssub.s32 256, 64
      %1196 = vsyncadd [#allocation4], %s1195
      %s1197 = sshll.u32 [#allocation7], 4
      %s1198 = int_to_ptr.vmem [resolvable:$true] %s1197
      %1203 = dma.vmem_to_hbm [thread:$0]  %s1198, 64, %s3, [#allocation4], 64, 64, 4
    $region25: #{tpu_custom_call.1} parent=1 // pred_fallthru
      _
    // Predicated region
    $region26: #{tpu_custom_call.1} parent=1 // pred_check
      _
    $region27: #{tpu_custom_call.1} parent=1 // pred_check_branch
      %1205 = sbr.rel (0) target = $region29
    $region28: #{tpu_custom_call.1} parent=1 // pred_region
      %1206 = dma.done [#allocation4], 256
    $region29: #{tpu_custom_call.1} parent=1 // pred_fallthru
      _
    %1207 = vsyncpa [#allocation3], 1
    %1208 = vsyncpa [#allocation6], 1
    %1209 = vsyncpa [#allocation4], 1

</llo_original>
